<compile_context>
chip_gen: v7x
topology: tpu7x:2x2x1
jax: 0.10.0
libtpu: 0.0.40
codegen_flags: <defaults>
</compile_context>

<pallas_src>
import functools

import jax
import jax.numpy as jnp
from jax.experimental import pallas as pl
from jax.experimental.pallas import tpu as pltpu


def _make_kernel(n_set: int):
    def kernel(x_ref,
               w1_ref, b1_ref, w2_ref, b2_ref,   # phi params (w bf16, b f32)
               w3_ref, b3_ref, w4_ref, b4_ref,   # rho params (w4 lane-padded)
               out_ref, acc_ref):
        k = pl.program_id(1)

        @pl.when(k == 0)
        def _init():
            acc_ref[...] = jnp.zeros_like(acc_ref)

        # ---- phi layer 1 on this (TB, TN) tile of set elements ----
        x = x_ref[...]                                    # (TB, TN, D_in) bf16
        tb, tn, d_in = x.shape
        h = jnp.dot(x.reshape(tb * tn, d_in), w1_ref[...],
                    preferred_element_type=jnp.float32) + b1_ref[...]
        h = jnp.maximum(h, 0.0)                           # (TB*TN, H_phi) f32

        # ---- partial permutation-invariant pooling (running VMEM accumulator) ----
        acc_ref[...] += jnp.sum(h.reshape(tb, tn, -1), axis=1)   # (TB, H_phi)

        @pl.when(k == pl.num_programs(1) - 1)
        def _finalize():
            # hoisted phi layer 2: pooled@W2 + N_set*b2  (bias scaled once by N)
            pooled = jnp.dot(acc_ref[...].astype(w2_ref.dtype), w2_ref[...],
                             preferred_element_type=jnp.float32)
            pooled = pooled + jnp.float32(n_set) * b2_ref[...]
            # ---- rho MLP ----
            r = jnp.dot(pooled.astype(w3_ref.dtype), w3_ref[...],
                        preferred_element_type=jnp.float32) + b3_ref[...]
            r = jnp.maximum(r, 0.0)
            r = jnp.dot(r.astype(w4_ref.dtype), w4_ref[...],
                        preferred_element_type=jnp.float32) + b4_ref[...]
            out_ref[...] = r.astype(out_ref.dtype)        # (TB, 128) lane-dense

    return kernel


def invariant_model(x, params, *, tb=8, tn=32):
    """x: (B, N_set, D_in) float32. Returns (B, D_out) float32."""
    w1, b1, w2, b2, w3, b3, w4, b4 = params
    B, N_set, D_in = x.shape
    H_phi = w1.shape[1]
    H_rho = w3.shape[1]
    D_out = w4.shape[1]
    assert B % tb == 0 and N_set % tn == 0

    # bf16 compute operands for the MXU; biases / accumulation stay f32.
    cdt = jnp.bfloat16
    x_c = x.astype(cdt)
    w1c, w2c, w3c = w1.astype(cdt), w2.astype(cdt), w3.astype(cdt)

    # Lane-dense output: pad the last layer to 128 output lanes, slice afterwards.
    d_pad = max(128, ((D_out + 127) // 128) * 128)
    w4p = jnp.zeros((H_rho, d_pad), cdt).at[:, :D_out].set(w4.astype(cdt))
    b4p = jnp.zeros((1, d_pad), jnp.float32).at[:, :D_out].set(b4)

    grid = (B // tb, N_set // tn)

    def wspec(a):
        return pl.BlockSpec(a.shape, lambda i, k: (0,) * a.ndim)

    flops = (2 * B * N_set * D_in * H_phi
             + 2 * B * (H_phi * H_phi + H_phi * H_rho + H_rho * d_pad))
    bytes_accessed = (x_c.size * 2
                      + (w1c.size + w2c.size + w3c.size + w4p.size) * 2
                      + (b1.size + b2.size + b3.size + b4p.size) * 4
                      + B * d_pad * 4)

    out = pl.pallas_call(
        _make_kernel(N_set),
        out_shape=jax.ShapeDtypeStruct((B, d_pad), jnp.float32),
        grid=grid,
        in_specs=[pl.BlockSpec((tb, tn, D_in), lambda i, k: (i, k, 0)),
                  wspec(w1c), wspec(b1), wspec(w2c), wspec(b2),
                  wspec(w3c), wspec(b3), wspec(w4p), wspec(b4p)],
        out_specs=pl.BlockSpec((tb, d_pad), lambda i, k: (i, 0)),
        scratch_shapes=[pltpu.VMEM((tb, H_phi), jnp.float32)],
        compiler_params=pltpu.CompilerParams(
            dimension_semantics=("parallel", "arbitrary")),
        cost_estimate=pl.CostEstimate(flops=flops, transcendentals=0,
                                      bytes_accessed=bytes_accessed),
    )(x_c, w1c, b1, w2c, b2, w3c, b3, w4p, b4p)

    return out[:, :D_out]


def make_params(key, d_in, h_phi, h_rho, d_out):
    """Deterministic synthetic params (PyTorch Linear init, stored (in, out))."""
    ks = jax.random.split(key, 8)

    def lin(kw, kb, fan_in, fan_out):
        lim = 1.0 / jnp.sqrt(fan_in)
        w = jax.random.uniform(kw, (fan_in, fan_out), jnp.float32, -lim, lim)
        b = jax.random.uniform(kb, (1, fan_out), jnp.float32, -lim, lim)
        return w, b

    w1, b1 = lin(ks[0], ks[1], d_in, h_phi)    # phi layer 1
    w2, b2 = lin(ks[2], ks[3], h_phi, h_phi)   # phi layer 2
    w3, b3 = lin(ks[4], ks[5], h_phi, h_rho)   # rho layer 1
    w4, b4 = lin(ks[6], ks[7], h_rho, d_out)   # rho layer 2
    return (w1, b1, w2, b2, w3, b3, w4, b4)


def _reference(x, params):
    """Straight Deep Sets reference (torch semantics), f32 math, no hoist."""
    w1, b1, w2, b2, w3, b3, w4, b4 = params
    h = jnp.maximum(jnp.einsum('bnd,dh->bnh', x, w1) + b1, 0.0)
    h = jnp.einsum('bnh,hk->bnk', h, w2) + b2
    s = jnp.sum(h, axis=1)                     # torch.sum(dim=0) per set
    r = jnp.maximum(s @ w3 + b3, 0.0)
    return r @ w4 + b4


if __name__ == "__main__":
    B, N_SET, D_IN, H_PHI, H_RHO, D_OUT = 16, 64, 32, 64, 64, 16

    key = jax.random.PRNGKey(0)
    kx, kp = jax.random.split(key)
    x = jax.random.normal(kx, (B, N_SET, D_IN), jnp.float32)
    params = make_params(kp, D_IN, H_PHI, H_RHO, D_OUT)

    out = invariant_model(x, params, tb=8, tn=32)
    out = jax.block_until_ready(out)
    assert out.shape == (B, D_OUT)

    # Reference with the same bf16-rounded x / weights (biases stay f32).
    params_r = tuple(p.astype(jnp.bfloat16).astype(jnp.float32) if i % 2 == 0 else p
                     for i, p in enumerate(params))
    ref = _reference(x.astype(jnp.bfloat16).astype(jnp.float32), params_r)

    rel = float(jnp.max(jnp.abs(out - ref)) / (jnp.max(jnp.abs(ref)) + 1e-6))
    assert rel < 2e-2, f"mismatch vs JAX reference: rel_err={rel:.4g}"

    print("KERNEL_OK")
</pallas_src>

<mosaic_0001>
module attributes {stable_mosaic.version = 11 : i64} {
  func.func @kernel(%arg0: i32, %arg1: i32, %arg2: memref<8x32x32xbf16, #tpu.memory_space<vmem>>, %arg3: memref<32x64xbf16, #tpu.memory_space<vmem>>, %arg4: memref<1x64xf32, #tpu.memory_space<vmem>>, %arg5: memref<64x64xbf16, #tpu.memory_space<vmem>>, %arg6: memref<1x64xf32, #tpu.memory_space<vmem>>, %arg7: memref<64x64xbf16, #tpu.memory_space<vmem>>, %arg8: memref<1x64xf32, #tpu.memory_space<vmem>>, %arg9: memref<64x128xbf16, #tpu.memory_space<vmem>>, %arg10: memref<1x128xf32, #tpu.memory_space<vmem>>, %arg11: memref<8x128xf32, #tpu.memory_space<vmem>>, %arg12: memref<8x64xf32, #tpu.memory_space<vmem>>) attributes {dimension_semantics = [#tpu.dimension_semantics<parallel>, #tpu.dimension_semantics<arbitrary>], iteration_bounds = array<i64: 2, 2>, scalar_prefetch = 0 : i64, scratch_operands = 1 : i64, tpu.core_type = #tpu.core_type<tc>, window_params = [{transform_indices = @transform_0, window_bounds = array<i64: 8, 32, 32>}, {pipeline_mode = #tpu.pipeline_mode<synchronous>, transform_indices = @transform_1, window_bounds = array<i64: 32, 64>}, {pipeline_mode = #tpu.pipeline_mode<synchronous>, transform_indices = @transform_2, window_bounds = array<i64: 1, 64>}, {pipeline_mode = #tpu.pipeline_mode<synchronous>, transform_indices = @transform_3, window_bounds = array<i64: 64, 64>}, {pipeline_mode = #tpu.pipeline_mode<synchronous>, transform_indices = @transform_4, window_bounds = array<i64: 1, 64>}, {pipeline_mode = #tpu.pipeline_mode<synchronous>, transform_indices = @transform_5, window_bounds = array<i64: 64, 64>}, {pipeline_mode = #tpu.pipeline_mode<synchronous>, transform_indices = @transform_6, window_bounds = array<i64: 1, 64>}, {pipeline_mode = #tpu.pipeline_mode<synchronous>, transform_indices = @transform_7, window_bounds = array<i64: 64, 128>}, {pipeline_mode = #tpu.pipeline_mode<synchronous>, transform_indices = @transform_8, window_bounds = array<i64: 1, 128>}, {transform_indices = @transform_9, window_bounds = array<i64: 8, 128>}]} {
    %c0_i32 = arith.constant 0 : i32
    %0 = arith.cmpi eq, %arg1, %c0_i32 : i32
    %1 = arith.extui %0 : i1 to i32
    %c0_i32_0 = arith.constant 0 : i32
    %2 = arith.cmpi ne, %1, %c0_i32_0 : i32
    scf.if %2 {
      %cst_14 = arith.constant 0.000000e+00 : f32
      %20 = vector.broadcast %cst_14 : f32 to vector<8x64xf32>
      %c0_15 = arith.constant 0 : index
      %c0_16 = arith.constant 0 : index
      %21 = vector.load %arg12[%c0_15, %c0_16] : memref<8x64xf32, #tpu.memory_space<vmem>>, vector<8x64xf32>
      tpu.vector_store %arg12[%c0_15, %c0_16], %20 {strides = array<i32>} : memref<8x64xf32, #tpu.memory_space<vmem>>, vector<8x64xf32>,
    } else {
    }
    %c0 = arith.constant 0 : index
    %c0_1 = arith.constant 0 : index
    %c0_2 = arith.constant 0 : index
    %3 = vector.load %arg2[%c0, %c0_1, %c0_2] : memref<8x32x32xbf16, #tpu.memory_space<vmem>>, vector<8x32x32xbf16>
    %4 = vector.shape_cast %3 : vector<8x32x32xbf16> to vector<256x32xbf16>
    %c0_3 = arith.constant 0 : index
    %c0_4 = arith.constant 0 : index
    %5 = vector.load %arg3[%c0_3, %c0_4] : memref<32x64xbf16, #tpu.memory_space<vmem>>, vector<32x64xbf16>
    %cst = arith.constant dense<0.000000e+00> : vector<256x64xf32>
    %6 = tpu.matmul %4, %5, %cst {dimension_numbers = #tpu.dot_dimension_numbers<[1], [0], [0], [1], [0, 0, 1, 1], [], []>} : vector<256x32xbf16>, vector<32x64xbf16>, vector<256x64xf32> -> vector<256x64xf32>
    %c0_5 = arith.constant 0 : index
    %c0_6 = arith.constant 0 : index
    %7 = vector.load %arg4[%c0_5, %c0_6] : memref<1x64xf32, #tpu.memory_space<vmem>>, vector<1x64xf32>
    %8 = vector.broadcast %7 : vector<1x64xf32> to vector<256x64xf32>
    %9 = arith.addf %6, %8 : vector<256x64xf32>
    %cst_7 = arith.constant 0.000000e+00 : f32
    %10 = vector.broadcast %cst_7 : f32 to vector<256x64xf32>
    %11 = arith.maximumf %9, %10 : vector<256x64xf32>
    %c0_8 = arith.constant 0 : index
    %c0_9 = arith.constant 0 : index
    %12 = vector.load %arg12[%c0_8, %c0_9] : memref<8x64xf32, #tpu.memory_space<vmem>>, vector<8x64xf32>
    %13 = vector.shape_cast %11 : vector<256x64xf32> to vector<8x32x64xf32>
    %cst_10 = arith.constant dense<0.000000e+00> : vector<8x64xf32>
    %14 = vector.multi_reduction <add>, %13, %cst_10 [1] : vector<8x32x64xf32> to vector<8x64xf32>
    %15 = arith.addf %12, %14 : vector<8x64xf32>
    %c0_11 = arith.constant 0 : index
    %c0_12 = arith.constant 0 : index
    %16 = vector.load %arg12[%c0_11, %c0_12] : memref<8x64xf32, #tpu.memory_space<vmem>>, vector<8x64xf32>
    tpu.vector_store %arg12[%c0_11, %c0_12], %15 {strides = array<i32>} : memref<8x64xf32, #tpu.memory_space<vmem>>, vector<8x64xf32>,
    %c1_i32 = arith.constant 1 : i32
    %17 = arith.cmpi eq, %arg1, %c1_i32 : i32
    %18 = arith.extui %17 : i1 to i32
    %c0_i32_13 = arith.constant 0 : i32
    %19 = arith.cmpi ne, %18, %c0_i32_13 : i32
    scf.if %19 {
      %c0_14 = arith.constant 0 : index
      %c0_15 = arith.constant 0 : index
      %20 = vector.load %arg12[%c0_14, %c0_15] : memref<8x64xf32, #tpu.memory_space<vmem>>, vector<8x64xf32>
      %21 = arith.truncf %20 : vector<8x64xf32> to vector<8x64xbf16>
      %c0_16 = arith.constant 0 : index
      %c0_17 = arith.constant 0 : index
      %22 = vector.load %arg5[%c0_16, %c0_17] : memref<64x64xbf16, #tpu.memory_space<vmem>>, vector<64x64xbf16>
      %cst_18 = arith.constant dense<0.000000e+00> : vector<8x64xf32>
      %23 = tpu.matmul %21, %22, %cst_18 {dimension_numbers = #tpu.dot_dimension_numbers<[1], [0], [0], [1], [0, 0, 1, 1], [], []>} : vector<8x64xbf16>, vector<64x64xbf16>, vector<8x64xf32> -> vector<8x64xf32>
      %c0_19 = arith.constant 0 : index
      %c0_20 = arith.constant 0 : index
      %24 = vector.load %arg6[%c0_19, %c0_20] : memref<1x64xf32, #tpu.memory_space<vmem>>, vector<1x64xf32>
      %cst_21 = arith.constant 6.400000e+01 : f32
      %25 = vector.broadcast %cst_21 : f32 to vector<1x64xf32>
      %26 = arith.mulf %25, %24 : vector<1x64xf32>
      %27 = vector.broadcast %26 : vector<1x64xf32> to vector<8x64xf32>
      %28 = arith.addf %23, %27 : vector<8x64xf32>
      %29 = arith.truncf %28 : vector<8x64xf32> to vector<8x64xbf16>
      %c0_22 = arith.constant 0 : index
      %c0_23 = arith.constant 0 : index
      %30 = vector.load %arg7[%c0_22, %c0_23] : memref<64x64xbf16, #tpu.memory_space<vmem>>, vector<64x64xbf16>
      %cst_24 = arith.constant dense<0.000000e+00> : vector<8x64xf32>
      %31 = tpu.matmul %29, %30, %cst_24 {dimension_numbers = #tpu.dot_dimension_numbers<[1], [0], [0], [1], [0, 0, 1, 1], [], []>} : vector<8x64xbf16>, vector<64x64xbf16>, vector<8x64xf32> -> vector<8x64xf32>
      %c0_25 = arith.constant 0 : index
      %c0_26 = arith.constant 0 : index
      %32 = vector.load %arg8[%c0_25, %c0_26] : memref<1x64xf32, #tpu.memory_space<vmem>>, vector<1x64xf32>
      %33 = vector.broadcast %32 : vector<1x64xf32> to vector<8x64xf32>
      %34 = arith.addf %31, %33 : vector<8x64xf32>
      %cst_27 = arith.constant 0.000000e+00 : f32
      %35 = vector.broadcast %cst_27 : f32 to vector<8x64xf32>
      %36 = arith.maximumf %34, %35 : vector<8x64xf32>
      %37 = arith.truncf %36 : vector<8x64xf32> to vector<8x64xbf16>
      %c0_28 = arith.constant 0 : index
      %c0_29 = arith.constant 0 : index
      %38 = vector.load %arg9[%c0_28, %c0_29] : memref<64x128xbf16, #tpu.memory_space<vmem>>, vector<64x128xbf16>
      %cst_30 = arith.constant dense<0.000000e+00> : vector<8x128xf32>
      %39 = tpu.matmul %37, %38, %cst_30 {dimension_numbers = #tpu.dot_dimension_numbers<[1], [0], [0], [1], [0, 0, 1, 1], [], []>} : vector<8x64xbf16>, vector<64x128xbf16>, vector<8x128xf32> -> vector<8x128xf32>
      %c0_31 = arith.constant 0 : index
      %c0_32 = arith.constant 0 : index
      %40 = vector.load %arg10[%c0_31, %c0_32] : memref<1x128xf32, #tpu.memory_space<vmem>>, vector<1x128xf32>
      %41 = vector.broadcast %40 : vector<1x128xf32> to vector<8x128xf32>
      %42 = arith.addf %39, %41 : vector<8x128xf32>
      %c0_33 = arith.constant 0 : index
      %c0_34 = arith.constant 0 : index
      %43 = vector.load %arg11[%c0_33, %c0_34] : memref<8x128xf32, #tpu.memory_space<vmem>>, vector<8x128xf32>
      tpu.vector_store %arg11[%c0_33, %c0_34], %42 {strides = array<i32>} : memref<8x128xf32, #tpu.memory_space<vmem>>, vector<8x128xf32>,
    } else {
    }
    return
  }
  func.func @transform_0(%arg0: i32, %arg1: i32) -> (i32, i32, i32) {
    %c0_i32 = arith.constant 0 : i32
    %c0_i32_0 = arith.constant 0 : i32
    return %arg0, %arg1, %c0_i32 : i32, i32, i32
  }
  func.func @transform_1(%arg0: i32, %arg1: i32) -> (i32, i32) {
    %c0_i32 = arith.constant 0 : i32
    %c0_i32_0 = arith.constant 0 : i32
    %c0_i32_1 = arith.constant 0 : i32
    return %c0_i32, %c0_i32_0 : i32, i32
  }
  func.func @transform_2(%arg0: i32, %arg1: i32) -> (i32, i32) {
    %c0_i32 = arith.constant 0 : i32
    %c0_i32_0 = arith.constant 0 : i32
    %c0_i32_1 = arith.constant 0 : i32
    return %c0_i32, %c0_i32_0 : i32, i32
  }
  func.func @transform_3(%arg0: i32, %arg1: i32) -> (i32, i32) {
    %c0_i32 = arith.constant 0 : i32
    %c0_i32_0 = arith.constant 0 : i32
    %c0_i32_1 = arith.constant 0 : i32
    return %c0_i32, %c0_i32_0 : i32, i32
  }
  func.func @transform_4(%arg0: i32, %arg1: i32) -> (i32, i32) {
    %c0_i32 = arith.constant 0 : i32
    %c0_i32_0 = arith.constant 0 : i32
    %c0_i32_1 = arith.constant 0 : i32
    return %c0_i32, %c0_i32_0 : i32, i32
  }
  func.func @transform_5(%arg0: i32, %arg1: i32) -> (i32, i32) {
    %c0_i32 = arith.constant 0 : i32
    %c0_i32_0 = arith.constant 0 : i32
    %c0_i32_1 = arith.constant 0 : i32
    return %c0_i32, %c0_i32_0 : i32, i32
  }
  func.func @transform_6(%arg0: i32, %arg1: i32) -> (i32, i32) {
    %c0_i32 = arith.constant 0 : i32
    %c0_i32_0 = arith.constant 0 : i32
    %c0_i32_1 = arith.constant 0 : i32
    return %c0_i32, %c0_i32_0 : i32, i32
  }
  func.func @transform_7(%arg0: i32, %arg1: i32) -> (i32, i32) {
    %c0_i32 = arith.constant 0 : i32
    %c0_i32_0 = arith.constant 0 : i32
    %c0_i32_1 = arith.constant 0 : i32
    return %c0_i32, %c0_i32_0 : i32, i32
  }
  func.func @transform_8(%arg0: i32, %arg1: i32) -> (i32, i32) {
    %c0_i32 = arith.constant 0 : i32
    %c0_i32_0 = arith.constant 0 : i32
    %c0_i32_1 = arith.constant 0 : i32
    return %c0_i32, %c0_i32_0 : i32, i32
  }
  func.func @transform_9(%arg0: i32, %arg1: i32) -> (i32, i32) {
    %c0_i32 = arith.constant 0 : i32
    %c0_i32_0 = arith.constant 0 : i32
    return %arg0, %c0_i32 : i32, i32
  }
}

</mosaic_0001>

<llo_original>
// kernel: tpu_custom_call.1
$region0: #{tpu_custom_call.1}
  #allocation0 [shape = 'u32[]', space=smem, size = 0x4, offset = 0x4, fixed_abs, tag = 'smem constant byte address 0x4 - core index']
  #allocation1 [shape = 'u32[144,128]{1,0:T(1,128)}', space=vmem, size = 0x12000, scoped, tag = 'internal scratch']
  #allocation2 [shape = 'f32[8,64]{1,0:T(8,128)}', space=vmem, size = 0x1000, scoped, tag = 'scratch operand']
  %s0 = inlined_call_operand.vmem [shape: bf16[16,64,32], index: 0, kind: input, shape index: {}]
  %s1 = inlined_call_operand.vmem [shape: bf16[32,64], index: 1, kind: input, shape index: {}]
  %s2 = inlined_call_operand.vmem [shape: f32[1,64], index: 2, kind: input, shape index: {}]
  %s3 = inlined_call_operand.vmem [shape: bf16[64,64], index: 3, kind: input, shape index: {}]
  %s4 = inlined_call_operand.vmem [shape: f32[1,64], index: 4, kind: input, shape index: {}]
  %s5 = inlined_call_operand.vmem [shape: bf16[64,64], index: 5, kind: input, shape index: {}]
  %s6 = inlined_call_operand.vmem [shape: f32[1,64], index: 6, kind: input, shape index: {}]
  %s7 = inlined_call_operand.vmem [shape: bf16[64,128], index: 7, kind: input, shape index: {}]
  %s8 = inlined_call_operand.vmem [shape: f32[1,128], index: 8, kind: input, shape index: {}]
  %s9 = inlined_call_operand.hbm [shape: f32[16,128], index: 9, kind: output, shape index: {}]
  %s10 = sld [smem:[#allocation0]]
  $region118: #{tpu_custom_call.1} parent=0
    _
  %s12 = ssub.s32 1, %s10
  %s13 = scalar_select 0, %s12, %s10
  $region1: #{tpu_custom_call.1} parent=0
    #allocation3 [shape = 'u8[131072]{0}', space=vmem, size = 0x20000, scoped, tag = 'input window, operand 0']
    #allocation4 [shape = 'u8[8192]{0}', space=vmem, size = 0x2000, scoped, tag = 'output window, operand 0']
    #allocation5 [shape = 's32[2]{0}', space=sflag, size = 0x8, scoped, tag = 'scoped memory for tpu_custom_call.1']
    %14 = vsyncpa [#allocation5], 0
    %s15 = scalar_lea.sflag [#allocation5], 1
    %16 = vsyncpa %s15, 0
    loop: start=0, step=1, limit=6
    $region2: #{tpu_custom_call.1} parent=1 // loop_pre_header
      _
    $region3: #{tpu_custom_call.1} parent=1 // loop_header
      %s18 = sphi 0, %s22
      %p19 = scmp.ge.s32.totalorder %s18, 6
      %s25 = sphi 0, %s37
      %s26 = sphi 0, %s33
      %s27 = sphi 0, %s25
      %s28 = sphi 0, %s26
      %s29 = sphi 0, %s27
      %s30 = sphi 0, %s28
      %s42 = sphi 0, %s44
      %s45 = sphi 0, %s42
      %s46 = sphi 0, %s45
      %s62 = sphi 0, %s46
      %s66 = sphi 0, %s66
      %s68 = sphi 0, %s66
      %s69 = sphi 0, %s68
      %s83 = sphi 0, %s69
      %s87 = sphi 0, %s87
      %s89 = sphi 0, %s87
      %s90 = sphi 0, %s89
      %s104 = sphi 0, %s90
      %s108 = sphi 0, %s108
      %s110 = sphi 0, %s108
      %s111 = sphi 0, %s110
      %s125 = sphi 0, %s111
      %s129 = sphi 0, %s129
      %s131 = sphi 0, %s129
      %s132 = sphi 0, %s131
      %s146 = sphi 0, %s132
      %s150 = sphi 0, %s150
      %s152 = sphi 0, %s150
      %s153 = sphi 0, %s152
      %s167 = sphi 0, %s153
      %s171 = sphi 0, %s171
      %s173 = sphi 0, %s171
      %s174 = sphi 0, %s173
      %s188 = sphi 0, %s174
      %s192 = sphi 0, %s192
      %s194 = sphi 0, %s192
      %s195 = sphi 0, %s194
      %s209 = sphi 0, %s195
      %s213 = sphi 0, %s213
      %s215 = sphi 0, %s213
      %s216 = sphi 0, %s215
      %s230 = sphi 0, %s216
      %s236 = sphi 0, %s238
      %s239 = sphi 0, %s236
      %s240 = sphi 0, %s239
      %s256 = sphi 0, %s240
    $region4: #{tpu_custom_call.1} parent=1 // loop_header_branch
      %21 = sbr.rel (%p19) target = $region8
    $region5: #{tpu_custom_call.1} parent=1 // loop_body
      %s23 = ssub.s32 %s18, 1
      %s24 = ssub.s32 %s18, 2
      %s31 = sadd.s32 1, %s26
      %p32 = scmp.ge.s32.totalorder %s31, 2
      %s33 = scalar_select %p32, 0, %s31
      %s34 = sadd.s32 1, %s25
      %s35 = scalar_select %p32, %s34, %s25
      %p36 = scmp.ge.s32.totalorder %s35, 2
      %s37 = scalar_select %p36, 0, %s35
      %s38 = ssub.s32 %s25, %s37
      %s39 = ssub.s32 %s26, %s33
      %s40 = sor.u32 %s38, %s39
      %p41 = scmp.eq.s32.totalorder %s40, 0
      %s43 = sadd.s32 %s42, 1
      %s44 = scalar_select %p41, %s42, %s43
      %p47 = pneg %p41
      %p48 = scmp.eq.s32.totalorder %s18, 3
      %p49 = por %p47, %p48
      %p50 = scmp.ne.s32.totalorder %s42, %s45
      %p51 = scmp.eq.s32.totalorder %s18, 0
      %p52 = por %p50, %p51
      %p53 = scmp.ne.s32.totalorder %s42, %s45
      %p54 = scmp.eq.s32.totalorder %s23, 3
      %p55 = por %p53, %p54
      %p56 = scmp.ne.s32.totalorder %s45, %s46
      %p57 = scmp.eq.s32.totalorder %s23, 0
      %p58 = por %p56, %p57
      %p59 = scmp.ne.s32.totalorder %s45, %s46
      %p60 = scmp.eq.s32.totalorder %s24, 3
      %p61 = por %p59, %p60
      %p63 = scmp.ne.s32.totalorder %s46, %s62
      %p64 = scmp.eq.s32.totalorder %s24, 0
      %p65 = por %p63, %p64
      %s67 = sadd.s32 %s66, 1
      %p70 = scmp.eq.s32.totalorder %s18, 3
      %p71 = scmp.ne.s32.totalorder %s66, %s68
      %p72 = scmp.eq.s32.totalorder %s18, 0
      %p73 = por %p71, %p72
      %p74 = scmp.ne.s32.totalorder %s66, %s68
      %p75 = scmp.eq.s32.totalorder %s23, 3
      %p76 = por %p74, %p75
      %p77 = scmp.ne.s32.totalorder %s68, %s69
      %p78 = scmp.eq.s32.totalorder %s23, 0
      %p79 = por %p77, %p78
      %p80 = scmp.ne.s32.totalorder %s68, %s69
      %p81 = scmp.eq.s32.totalorder %s24, 3
      %p82 = por %p80, %p81
      %p84 = scmp.ne.s32.totalorder %s69, %s83
      %p85 = scmp.eq.s32.totalorder %s24, 0
      %p86 = por %p84, %p85
      %s88 = sadd.s32 %s87, 1
      %p91 = scmp.eq.s32.totalorder %s18, 3
      %p92 = scmp.ne.s32.totalorder %s87, %s89
      %p93 = scmp.eq.s32.totalorder %s18, 0
      %p94 = por %p92, %p93
      %p95 = scmp.ne.s32.totalorder %s87, %s89
      %p96 = scmp.eq.s32.totalorder %s23, 3
      %p97 = por %p95, %p96
      %p98 = scmp.ne.s32.totalorder %s89, %s90
      %p99 = scmp.eq.s32.totalorder %s23, 0
      %p100 = por %p98, %p99
      %p101 = scmp.ne.s32.totalorder %s89, %s90
      %p102 = scmp.eq.s32.totalorder %s24, 3
      %p103 = por %p101, %p102
      %p105 = scmp.ne.s32.totalorder %s90, %s104
      %p106 = scmp.eq.s32.totalorder %s24, 0
      %p107 = por %p105, %p106
      %s109 = sadd.s32 %s108, 1
      %p112 = scmp.eq.s32.totalorder %s18, 3
      %p113 = scmp.ne.s32.totalorder %s108, %s110
      %p114 = scmp.eq.s32.totalorder %s18, 0
      %p115 = por %p113, %p114
      %p116 = scmp.ne.s32.totalorder %s108, %s110
      %p117 = scmp.eq.s32.totalorder %s23, 3
      %p118 = por %p116, %p117
      %p119 = scmp.ne.s32.totalorder %s110, %s111
      %p120 = scmp.eq.s32.totalorder %s23, 0
      %p121 = por %p119, %p120
      %p122 = scmp.ne.s32.totalorder %s110, %s111
      %p123 = scmp.eq.s32.totalorder %s24, 3
      %p124 = por %p122, %p123
      %p126 = scmp.ne.s32.totalorder %s111, %s125
      %p127 = scmp.eq.s32.totalorder %s24, 0
      %p128 = por %p126, %p127
      %s130 = sadd.s32 %s129, 1
      %p133 = scmp.eq.s32.totalorder %s18, 3
      %p134 = scmp.ne.s32.totalorder %s129, %s131
      %p135 = scmp.eq.s32.totalorder %s18, 0
      %p136 = por %p134, %p135
      %p137 = scmp.ne.s32.totalorder %s129, %s131
      %p138 = scmp.eq.s32.totalorder %s23, 3
      %p139 = por %p137, %p138
      %p140 = scmp.ne.s32.totalorder %s131, %s132
      %p141 = scmp.eq.s32.totalorder %s23, 0
      %p142 = por %p140, %p141
      %p143 = scmp.ne.s32.totalorder %s131, %s132
      %p144 = scmp.eq.s32.totalorder %s24, 3
      %p145 = por %p143, %p144
      %p147 = scmp.ne.s32.totalorder %s132, %s146
      %p148 = scmp.eq.s32.totalorder %s24, 0
      %p149 = por %p147, %p148
      %s151 = sadd.s32 %s150, 1
      %p154 = scmp.eq.s32.totalorder %s18, 3
      %p155 = scmp.ne.s32.totalorder %s150, %s152
      %p156 = scmp.eq.s32.totalorder %s18, 0
      %p157 = por %p155, %p156
      %p158 = scmp.ne.s32.totalorder %s150, %s152
      %p159 = scmp.eq.s32.totalorder %s23, 3
      %p160 = por %p158, %p159
      %p161 = scmp.ne.s32.totalorder %s152, %s153
      %p162 = scmp.eq.s32.totalorder %s23, 0
      %p163 = por %p161, %p162
      %p164 = scmp.ne.s32.totalorder %s152, %s153
      %p165 = scmp.eq.s32.totalorder %s24, 3
      %p166 = por %p164, %p165
      %p168 = scmp.ne.s32.totalorder %s153, %s167
      %p169 = scmp.eq.s32.totalorder %s24, 0
      %p170 = por %p168, %p169
      %s172 = sadd.s32 %s171, 1
      %p175 = scmp.eq.s32.totalorder %s18, 3
      %p176 = scmp.ne.s32.totalorder %s171, %s173
      %p177 = scmp.eq.s32.totalorder %s18, 0
      %p178 = por %p176, %p177
      %p179 = scmp.ne.s32.totalorder %s171, %s173
      %p180 = scmp.eq.s32.totalorder %s23, 3
      %p181 = por %p179, %p180
      %p182 = scmp.ne.s32.totalorder %s173, %s174
      %p183 = scmp.eq.s32.totalorder %s23, 0
      %p184 = por %p182, %p183
      %p185 = scmp.ne.s32.totalorder %s173, %s174
      %p186 = scmp.eq.s32.totalorder %s24, 3
      %p187 = por %p185, %p186
      %p189 = scmp.ne.s32.totalorder %s174, %s188
      %p190 = scmp.eq.s32.totalorder %s24, 0
      %p191 = por %p189, %p190
      %s193 = sadd.s32 %s192, 1
      %p196 = scmp.eq.s32.totalorder %s18, 3
      %p197 = scmp.ne.s32.totalorder %s192, %s194
      %p198 = scmp.eq.s32.totalorder %s18, 0
      %p199 = por %p197, %p198
      %p200 = scmp.ne.s32.totalorder %s192, %s194
      %p201 = scmp.eq.s32.totalorder %s23, 3
      %p202 = por %p200, %p201
      %p203 = scmp.ne.s32.totalorder %s194, %s195
      %p204 = scmp.eq.s32.totalorder %s23, 0
      %p205 = por %p203, %p204
      %p206 = scmp.ne.s32.totalorder %s194, %s195
      %p207 = scmp.eq.s32.totalorder %s24, 3
      %p208 = por %p206, %p207
      %p210 = scmp.ne.s32.totalorder %s195, %s209
      %p211 = scmp.eq.s32.totalorder %s24, 0
      %p212 = por %p210, %p211
      %s214 = sadd.s32 %s213, 1
      %p217 = scmp.eq.s32.totalorder %s18, 3
      %p218 = scmp.ne.s32.totalorder %s213, %s215
      %p219 = scmp.eq.s32.totalorder %s18, 0
      %p220 = por %p218, %p219
      %p221 = scmp.ne.s32.totalorder %s213, %s215
      %p222 = scmp.eq.s32.totalorder %s23, 3
      %p223 = por %p221, %p222
      %p224 = scmp.ne.s32.totalorder %s215, %s216
      %p225 = scmp.eq.s32.totalorder %s23, 0
      %p226 = por %p224, %p225
      %p227 = scmp.ne.s32.totalorder %s215, %s216
      %p228 = scmp.eq.s32.totalorder %s24, 3
      %p229 = por %p227, %p228
      %p231 = scmp.ne.s32.totalorder %s216, %s230
      %p232 = scmp.eq.s32.totalorder %s24, 0
      %p233 = por %p231, %p232
      %s234 = ssub.s32 %s25, %s37
      %p235 = scmp.eq.s32.totalorder %s234, 0
      %s237 = sadd.s32 %s236, 1
      %s238 = scalar_select %p235, %s236, %s237
      %p241 = pneg %p235
      %p242 = scmp.eq.s32.totalorder %s18, 3
      %p243 = por %p241, %p242
      %p244 = scmp.ne.s32.totalorder %s236, %s239
      %p245 = scmp.eq.s32.totalorder %s18, 0
      %p246 = por %p244, %p245
      %p247 = scmp.ne.s32.totalorder %s236, %s239
      %p248 = scmp.eq.s32.totalorder %s23, 3
      %p249 = por %p247, %p248
      %p250 = scmp.ne.s32.totalorder %s239, %s240
      %p251 = scmp.eq.s32.totalorder %s23, 0
      %p252 = por %p250, %p251
      %p253 = scmp.ne.s32.totalorder %s239, %s240
      %p254 = scmp.eq.s32.totalorder %s24, 3
      %p255 = por %p253, %p254
      %p257 = scmp.ne.s32.totalorder %s240, %s256
      %p258 = scmp.eq.s32.totalorder %s24, 0
      %p259 = por %p257, %p258
      %p260 = scmp.le.s32.totalorder 1, %s18
      %p261 = scmp.lt.s32.totalorder %s18, 5
      %p262 = pnand %p260, %p261
      %p263 = pneg %p262
      // Predicated region
      $region9: #{tpu_custom_call.1} parent=5 // pred_check
        _
      $region10: #{tpu_custom_call.1} parent=5 // pred_check_branch
        %265 = sbr.rel (%p262) target = $region12
      $region11: #{tpu_custom_call.1} parent=5 // pred_region
        %s266 = ssub.s32 %s18, 1
        // Predicated region
        $region13: #{tpu_custom_call.1} parent=11 // pred_check
          %p267 = pneg %p79
        $region14: #{tpu_custom_call.1} parent=11 // pred_check_branch
          %269 = sbr.rel (%p267) target = $region16
        $region15: #{tpu_custom_call.1} parent=11 // pred_region
          _
        $region16: #{tpu_custom_call.1} parent=11 // pred_fallthru
          _
        // Predicated region
        $region17: #{tpu_custom_call.1} parent=11 // pred_check
          %p270 = pneg %p100
        $region18: #{tpu_custom_call.1} parent=11 // pred_check_branch
          %272 = sbr.rel (%p270) target = $region20
        $region19: #{tpu_custom_call.1} parent=11 // pred_region
          _
        $region20: #{tpu_custom_call.1} parent=11 // pred_fallthru
          _
        // Predicated region
        $region21: #{tpu_custom_call.1} parent=11 // pred_check
          %p273 = pneg %p121
        $region22: #{tpu_custom_call.1} parent=11 // pred_check_branch
          %275 = sbr.rel (%p273) target = $region24
        $region23: #{tpu_custom_call.1} parent=11 // pred_region
          _
        $region24: #{tpu_custom_call.1} parent=11 // pred_fallthru
          _
        // Predicated region
        $region25: #{tpu_custom_call.1} parent=11 // pred_check
          %p276 = pneg %p142
        $region26: #{tpu_custom_call.1} parent=11 // pred_check_branch
          %278 = sbr.rel (%p276) target = $region28
        $region27: #{tpu_custom_call.1} parent=11 // pred_region
          _
        $region28: #{tpu_custom_call.1} parent=11 // pred_fallthru
          _
        // Predicated region
        $region29: #{tpu_custom_call.1} parent=11 // pred_check
          %p279 = pneg %p163
        $region30: #{tpu_custom_call.1} parent=11 // pred_check_branch
          %281 = sbr.rel (%p279) target = $region32
        $region31: #{tpu_custom_call.1} parent=11 // pred_region
          _
        $region32: #{tpu_custom_call.1} parent=11 // pred_fallthru
          _
        // Predicated region
        $region33: #{tpu_custom_call.1} parent=11 // pred_check
          %p282 = pneg %p184
        $region34: #{tpu_custom_call.1} parent=11 // pred_check_branch
          %284 = sbr.rel (%p282) target = $region36
        $region35: #{tpu_custom_call.1} parent=11 // pred_region
          _
        $region36: #{tpu_custom_call.1} parent=11 // pred_fallthru
          _
        // Predicated region
        $region37: #{tpu_custom_call.1} parent=11 // pred_check
          %p285 = pneg %p205
        $region38: #{tpu_custom_call.1} parent=11 // pred_check_branch
          %287 = sbr.rel (%p285) target = $region40
        $region39: #{tpu_custom_call.1} parent=11 // pred_region
          _
        $region40: #{tpu_custom_call.1} parent=11 // pred_fallthru
          _
        // Predicated region
        $region41: #{tpu_custom_call.1} parent=11 // pred_check
          %p288 = pneg %p226
        $region42: #{tpu_custom_call.1} parent=11 // pred_check_branch
          %290 = sbr.rel (%p288) target = $region44
        $region43: #{tpu_custom_call.1} parent=11 // pred_region
          _
        $region44: #{tpu_custom_call.1} parent=11 // pred_fallthru
          _
      $region12: #{tpu_custom_call.1} parent=5 // pred_fallthru
        _
      %p291 = scmp.lt.s32.totalorder %s18, 4
      // Predicated region
      $region45: #{tpu_custom_call.1} parent=5 // pred_check
        %p292 = pneg %p291
      $region46: #{tpu_custom_call.1} parent=5 // pred_check_branch
        %294 = sbr.rel (%p292) target = $region48
      $region47: #{tpu_custom_call.1} parent=5 // pred_region
        // Predicated region
        $region49: #{tpu_custom_call.1} parent=47 // pred_check
          %p295 = pneg %p52
        $region50: #{tpu_custom_call.1} parent=47 // pred_check_branch
          %297 = sbr.rel (%p295) target = $region52
        $region51: #{tpu_custom_call.1} parent=47 // pred_region
          %s298 = sand.u32 %s42, 1
          %s299 = sand.u32 %s42, 1
          %s300 = smul.addr %s299, 128
          %s301 = scalar_lea.vmem [#allocation3], %s300
          %s302 = smul.u32 8, %s25
          %s303 = smul.u32 4, %s26
          %s304 = smul.addr %s302, 8
          %s305 = sadd.s32 %s303, %s304
          %s306 = smul.addr %s305, 4
          %s307 = scalar_lea.vmem %s0, %s306
          // Predicated region
          $region53: #{tpu_custom_call.1} parent=51 // pred_check
            _
          $region54: #{tpu_custom_call.1} parent=51 // pred_check_branch
            %309 = sbr.rel (0) target = $region56
          $region55: #{tpu_custom_call.1} parent=51 // pred_region
            // Predicated region
            $region57: #{tpu_custom_call.1} parent=55 // pred_check
              _
            $region58: #{tpu_custom_call.1} parent=55 // pred_check_branch
              %311 = sbr.rel target = $region60
            $region59: #{tpu_custom_call.1} parent=55 // pred_region
              // Predicated region
              $region72: #{tpu_custom_call.1} parent=59 // pred_check
                _
              $region73: #{tpu_custom_call.1} parent=59 // pred_check_branch
                %388 = sbr.rel (0) target = $region75
              $region74: #{tpu_custom_call.1} parent=59 // pred_region
                loop: start=0, step=1, limit=1
                $region76: #{tpu_custom_call.1} parent=74 // loop_pre_header
                  _
                $region77: #{tpu_custom_call.1} parent=74 // loop_header
                  %s390 = sphi 0, %s394
                  %p391 = scmp.ge.s32.totalorder %s390, 1
                  %s395 = sphi %s307, %s307
                  %s396 = sphi %s301, %s301
                $region78: #{tpu_custom_call.1} parent=74 // loop_header_branch
                  %393 = sbr.rel (%p391) target = $region82
                $region79: #{tpu_custom_call.1} parent=74 // loop_body
                  _
                $region80: #{tpu_custom_call.1} parent=74 // loop_footer
                  %s394 = sadd.s32 1, %s390
                $region81: #{tpu_custom_call.1} parent=74 // loop_footer_branch
                  %389 = sbr.rel target = $region77
                $region82: #{tpu_custom_call.1} parent=74 // loop_exit
                  _
                loop: start=0, step=1, limit=1
                $region83: #{tpu_custom_call.1} parent=74 // loop_pre_header
                  _
                $region84: #{tpu_custom_call.1} parent=74 // loop_header
                  %s399 = sphi 0, %s403
                  %p400 = scmp.ge.s32.totalorder %s399, 1
                  %s404 = sphi %s307, %s307
                  %s405 = sphi %s301, %s301
                $region85: #{tpu_custom_call.1} parent=74 // loop_header_branch
                  %402 = sbr.rel (%p400) target = $region89
                $region86: #{tpu_custom_call.1} parent=74 // loop_body
                  %v406 = vld [vmem:[%s404] sm:$0xf]
                  %407 = vst [vmem:[%s405] sm:$0xf] %v406
                  %v408 = vld [vmem:[%s404 + $0x4] sm:$0xf]
                  %409 = vst [vmem:[%s405 + $0x4] sm:$0xf] %v408
                  %v410 = vld [vmem:[%s404 + $0x8] sm:$0xf]
                  %411 = vst [vmem:[%s405 + $0x8] sm:$0xf] %v410
                  %v412 = vld [vmem:[%s404 + $0xc] sm:$0xf]
                  %413 = vst [vmem:[%s405 + $0xc] sm:$0xf] %v412
                  %v414 = vld [vmem:[%s404 + $0x20] sm:$0xf]
                  %415 = vst [vmem:[%s405 + $0x10] sm:$0xf] %v414
                  %v416 = vld [vmem:[%s404 + $0x24] sm:$0xf]
                  %417 = vst [vmem:[%s405 + $0x14] sm:$0xf] %v416
                  %v418 = vld [vmem:[%s404 + $0x28] sm:$0xf]
                  %419 = vst [vmem:[%s405 + $0x18] sm:$0xf] %v418
                  %v420 = vld [vmem:[%s404 + $0x2c] sm:$0xf]
                  %421 = vst [vmem:[%s405 + $0x1c] sm:$0xf] %v420
                  %v422 = vld [vmem:[%s404 + $0x40] sm:$0xf]
                  %423 = vst [vmem:[%s405 + $0x20] sm:$0xf] %v422
                  %v424 = vld [vmem:[%s404 + $0x44] sm:$0xf]
                  %425 = vst [vmem:[%s405 + $0x24] sm:$0xf] %v424
                  %v426 = vld [vmem:[%s404 + $0x48] sm:$0xf]
                  %427 = vst [vmem:[%s405 + $0x28] sm:$0xf] %v426
                  %v428 = vld [vmem:[%s404 + $0x4c] sm:$0xf]
                  %429 = vst [vmem:[%s405 + $0x2c] sm:$0xf] %v428
                  %v430 = vld [vmem:[%s404 + $0x60] sm:$0xf]
                  %431 = vst [vmem:[%s405 + $0x30] sm:$0xf] %v430
                  %v432 = vld [vmem:[%s404 + $0x64] sm:$0xf]
                  %433 = vst [vmem:[%s405 + $0x34] sm:$0xf] %v432
                  %v434 = vld [vmem:[%s404 + $0x68] sm:$0xf]
                  %435 = vst [vmem:[%s405 + $0x38] sm:$0xf] %v434
                  %v436 = vld [vmem:[%s404 + $0x6c] sm:$0xf]
                  %437 = vst [vmem:[%s405 + $0x3c] sm:$0xf] %v436
                  %v438 = vld [vmem:[%s404 + $0x80] sm:$0xf]
                  %439 = vst [vmem:[%s405 + $0x40] sm:$0xf] %v438
                  %v440 = vld [vmem:[%s404 + $0x84] sm:$0xf]
                  %441 = vst [vmem:[%s405 + $0x44] sm:$0xf] %v440
                  %v442 = vld [vmem:[%s404 + $0x88] sm:$0xf]
                  %443 = vst [vmem:[%s405 + $0x48] sm:$0xf] %v442
                  %v444 = vld [vmem:[%s404 + $0x8c] sm:$0xf]
                  %445 = vst [vmem:[%s405 + $0x4c] sm:$0xf] %v444
                  %v446 = vld [vmem:[%s404 + $0xa0] sm:$0xf]
                  %447 = vst [vmem:[%s405 + $0x50] sm:$0xf] %v446
                  %v448 = vld [vmem:[%s404 + $0xa4] sm:$0xf]
                  %449 = vst [vmem:[%s405 + $0x54] sm:$0xf] %v448
                  %v450 = vld [vmem:[%s404 + $0xa8] sm:$0xf]
                  %451 = vst [vmem:[%s405 + $0x58] sm:$0xf] %v450
                  %v452 = vld [vmem:[%s404 + $0xac] sm:$0xf]
                  %453 = vst [vmem:[%s405 + $0x5c] sm:$0xf] %v452
                  %v454 = vld [vmem:[%s404 + $0xc0] sm:$0xf]
                  %455 = vst [vmem:[%s405 + $0x60] sm:$0xf] %v454
                  %v456 = vld [vmem:[%s404 + $0xc4] sm:$0xf]
                  %457 = vst [vmem:[%s405 + $0x64] sm:$0xf] %v456
                  %v458 = vld [vmem:[%s404 + $0xc8] sm:$0xf]
                  %459 = vst [vmem:[%s405 + $0x68] sm:$0xf] %v458
                  %v460 = vld [vmem:[%s404 + $0xcc] sm:$0xf]
                  %461 = vst [vmem:[%s405 + $0x6c] sm:$0xf] %v460
                  %v462 = vld [vmem:[%s404 + $0xe0] sm:$0xf]
                  %463 = vst [vmem:[%s405 + $0x70] sm:$0xf] %v462
                  %v464 = vld [vmem:[%s404 + $0xe4] sm:$0xf]
                  %465 = vst [vmem:[%s405 + $0x74] sm:$0xf] %v464
                  %v466 = vld [vmem:[%s404 + $0xe8] sm:$0xf]
                  %467 = vst [vmem:[%s405 + $0x78] sm:$0xf] %v466
                  %v468 = vld [vmem:[%s404 + $0xec] sm:$0xf]
                  %469 = vst [vmem:[%s405 + $0x7c] sm:$0xf] %v468
                $region87: #{tpu_custom_call.1} parent=74 // loop_footer
                  %s403 = sadd.s32 1, %s399
                $region88: #{tpu_custom_call.1} parent=74 // loop_footer_branch
                  %398 = sbr.rel target = $region84
                $region89: #{tpu_custom_call.1} parent=74 // loop_exit
                  _
              $region75: #{tpu_custom_call.1} parent=59 // pred_fallthru
                _
            $region60: #{tpu_custom_call.1} parent=55 // pred_fallthru
              _
            // Predicated region
            $region61: #{tpu_custom_call.1} parent=55 // pred_check
              _
            $region62: #{tpu_custom_call.1} parent=55 // pred_check_branch
              %313 = sbr.rel (0) target = $region64
            $region63: #{tpu_custom_call.1} parent=55 // pred_region
              loop: start=0, step=1, limit=1
              $region65: #{tpu_custom_call.1} parent=63 // loop_pre_header
                _
              $region66: #{tpu_custom_call.1} parent=63 // loop_header
                %s316 = sphi 0, %s320
                %p317 = scmp.ge.s32.totalorder %s316, 1
                %s321 = sphi %s307, %s307
                %s322 = sphi %s301, %s301
              $region67: #{tpu_custom_call.1} parent=63 // loop_header_branch
                %319 = sbr.rel (%p317) target = $region71
              $region68: #{tpu_custom_call.1} parent=63 // loop_body
                %v323 = vld [vmem:[%s321] sm:$0xf]
                %324 = vst [vmem:[%s322] sm:$0xf] %v323
                %v325 = vld [vmem:[%s321 + $0x4] sm:$0xf]
                %326 = vst [vmem:[%s322 + $0x4] sm:$0xf] %v325
                %v327 = vld [vmem:[%s321 + $0x8] sm:$0xf]
                %328 = vst [vmem:[%s322 + $0x8] sm:$0xf] %v327
                %v329 = vld [vmem:[%s321 + $0xc] sm:$0xf]
                %330 = vst [vmem:[%s322 + $0xc] sm:$0xf] %v329
                %v331 = vld [vmem:[%s321 + $0x20] sm:$0xf]
                %332 = vst [vmem:[%s322 + $0x10] sm:$0xf] %v331
                %v333 = vld [vmem:[%s321 + $0x24] sm:$0xf]
                %334 = vst [vmem:[%s322 + $0x14] sm:$0xf] %v333
                %v335 = vld [vmem:[%s321 + $0x28] sm:$0xf]
                %336 = vst [vmem:[%s322 + $0x18] sm:$0xf] %v335
                %v337 = vld [vmem:[%s321 + $0x2c] sm:$0xf]
                %338 = vst [vmem:[%s322 + $0x1c] sm:$0xf] %v337
                %v339 = vld [vmem:[%s321 + $0x40] sm:$0xf]
                %340 = vst [vmem:[%s322 + $0x20] sm:$0xf] %v339
                %v341 = vld [vmem:[%s321 + $0x44] sm:$0xf]
                %342 = vst [vmem:[%s322 + $0x24] sm:$0xf] %v341
                %v343 = vld [vmem:[%s321 + $0x48] sm:$0xf]
                %344 = vst [vmem:[%s322 + $0x28] sm:$0xf] %v343
                %v345 = vld [vmem:[%s321 + $0x4c] sm:$0xf]
                %346 = vst [vmem:[%s322 + $0x2c] sm:$0xf] %v345
                %v347 = vld [vmem:[%s321 + $0x60] sm:$0xf]
                %348 = vst [vmem:[%s322 + $0x30] sm:$0xf] %v347
                %v349 = vld [vmem:[%s321 + $0x64] sm:$0xf]
                %350 = vst [vmem:[%s322 + $0x34] sm:$0xf] %v349
                %v351 = vld [vmem:[%s321 + $0x68] sm:$0xf]
                %352 = vst [vmem:[%s322 + $0x38] sm:$0xf] %v351
                %v353 = vld [vmem:[%s321 + $0x6c] sm:$0xf]
                %354 = vst [vmem:[%s322 + $0x3c] sm:$0xf] %v353
                %v355 = vld [vmem:[%s321 + $0x80] sm:$0xf]
                %356 = vst [vmem:[%s322 + $0x40] sm:$0xf] %v355
                %v357 = vld [vmem:[%s321 + $0x84] sm:$0xf]
                %358 = vst [vmem:[%s322 + $0x44] sm:$0xf] %v357
                %v359 = vld [vmem:[%s321 + $0x88] sm:$0xf]
                %360 = vst [vmem:[%s322 + $0x48] sm:$0xf] %v359
                %v361 = vld [vmem:[%s321 + $0x8c] sm:$0xf]
                %362 = vst [vmem:[%s322 + $0x4c] sm:$0xf] %v361
                %v363 = vld [vmem:[%s321 + $0xa0] sm:$0xf]
                %364 = vst [vmem:[%s322 + $0x50] sm:$0xf] %v363
                %v365 = vld [vmem:[%s321 + $0xa4] sm:$0xf]
                %366 = vst [vmem:[%s322 + $0x54] sm:$0xf] %v365
                %v367 = vld [vmem:[%s321 + $0xa8] sm:$0xf]
                %368 = vst [vmem:[%s322 + $0x58] sm:$0xf] %v367
                %v369 = vld [vmem:[%s321 + $0xac] sm:$0xf]
                %370 = vst [vmem:[%s322 + $0x5c] sm:$0xf] %v369
                %v371 = vld [vmem:[%s321 + $0xc0] sm:$0xf]
                %372 = vst [vmem:[%s322 + $0x60] sm:$0xf] %v371
                %v373 = vld [vmem:[%s321 + $0xc4] sm:$0xf]
                %374 = vst [vmem:[%s322 + $0x64] sm:$0xf] %v373
                %v375 = vld [vmem:[%s321 + $0xc8] sm:$0xf]
                %376 = vst [vmem:[%s322 + $0x68] sm:$0xf] %v375
                %v377 = vld [vmem:[%s321 + $0xcc] sm:$0xf]
                %378 = vst [vmem:[%s322 + $0x6c] sm:$0xf] %v377
                %v379 = vld [vmem:[%s321 + $0xe0] sm:$0xf]
                %380 = vst [vmem:[%s322 + $0x70] sm:$0xf] %v379
                %v381 = vld [vmem:[%s321 + $0xe4] sm:$0xf]
                %382 = vst [vmem:[%s322 + $0x74] sm:$0xf] %v381
                %v383 = vld [vmem:[%s321 + $0xe8] sm:$0xf]
                %384 = vst [vmem:[%s322 + $0x78] sm:$0xf] %v383
                %v385 = vld [vmem:[%s321 + $0xec] sm:$0xf]
                %386 = vst [vmem:[%s322 + $0x7c] sm:$0xf] %v385
              $region69: #{tpu_custom_call.1} parent=63 // loop_footer
                %s320 = sadd.s32 1, %s316
              $region70: #{tpu_custom_call.1} parent=63 // loop_footer_branch
                %315 = sbr.rel target = $region66
              $region71: #{tpu_custom_call.1} parent=63 // loop_exit
                _
            $region64: #{tpu_custom_call.1} parent=55 // pred_fallthru
              _
          $region56: #{tpu_custom_call.1} parent=51 // pred_fallthru
            _
          %470 = vnop
        $region52: #{tpu_custom_call.1} parent=47 // pred_fallthru
          _
      $region48: #{tpu_custom_call.1} parent=5 // pred_fallthru
        _
      %p471 = scmp.le.s32.totalorder 1, %s18
      %p472 = scmp.lt.s32.totalorder %s18, 5
      %p473 = pnand %p471, %p472
      %p474 = pneg %p473
      // Predicated region
      $region90: #{tpu_custom_call.1} parent=5 // pred_check
        _
      $region91: #{tpu_custom_call.1} parent=5 // pred_check_branch
        %476 = sbr.rel (%p473) target = $region93
      $region92: #{tpu_custom_call.1} parent=5 // pred_region
        %s477 = ssub.s32 %s18, 1
        %s478 = sand.u32 %s45, 1
        %s479 = sand.u32 %s45, 1
        %s480 = smul.addr %s479, 128
        %s481 = scalar_lea.vmem [#allocation3], %s480
        // Predicated region
        $region94: #{tpu_custom_call.1} parent=92 // pred_check
          %p482 = pneg %p58
        $region95: #{tpu_custom_call.1} parent=92 // pred_check_branch
          %484 = sbr.rel (%p482) target = $region97
        $region96: #{tpu_custom_call.1} parent=92 // pred_region
          _
        $region97: #{tpu_custom_call.1} parent=92 // pred_fallthru
          _
        %s485 = sand.u32 %s45, 1
        %s486 = sand.u32 %s45, 1
        %s487 = smul.addr %s486, 128
        %s488 = scalar_lea.vmem [#allocation3], %s487
        %p489 = pneg %p58
        %p490 = pneg %p55
        %p491 = pneg %p79
        %p492 = pneg %p76
        %p493 = pneg %p100
        %p494 = pneg %p97
        %p495 = pneg %p121
        %p496 = pneg %p118
        %p497 = pneg %p142
        %p498 = pneg %p139
        %p499 = pneg %p163
        %p500 = pneg %p160
        %p501 = pneg %p184
        %p502 = pneg %p181
        %p503 = pneg %p205
        %p504 = pneg %p202
        %p505 = pneg %p226
        %p506 = pneg %p223
        %p507 = pneg %p252
        %p508 = pneg %p249
        %s509 = sand.u32 %s239, 1
        %s510 = scalar_lea.sflag [#allocation5], %s509
        %s511 = sand.u32 %s239, 1
        %s512 = smul.addr %s511, 8
        %s513 = scalar_lea.vmem [#allocation4], %s512
        %s514 = smul.u32 8, %s27
        %s515 = smul.u32 4, %s28
        %p517 = scmp.eq.s32.totalorder %s28, 0
        // Predicated region
        $region98: #{tpu_custom_call.1} parent=92 // pred_check
          %p518 = pneg %p517
        $region99: #{tpu_custom_call.1} parent=92 // pred_check_branch
          %520 = sbr.rel (%p518) target = $region101
        $region100: #{tpu_custom_call.1} parent=92 // pred_region
          %vm521 = vcmask 523264
          %522 = vst.msk [vmem:[#allocation2] sm:$0xff] %vm521, 0.0
        $region101: #{tpu_custom_call.1} parent=92 // pred_fallthru
          _
        %v523 = vld [vmem:[%s481] sm:$0xf]
        %v524 = vld [vmem:[%s481 + $0x4] sm:$0xf]
        %v525 = vld [vmem:[%s481 + $0x8] sm:$0xf]
        %v526 = vld [vmem:[%s481 + $0xc] sm:$0xf]
        %v527 = vld [vmem:[%s481 + $0x10] sm:$0xf]
        %v528 = vld [vmem:[%s481 + $0x14] sm:$0xf]
        %v529 = vld [vmem:[%s481 + $0x18] sm:$0xf]
        %v530 = vld [vmem:[%s481 + $0x1c] sm:$0xf]
        %v531 = vld [vmem:[%s481 + $0x20] sm:$0xf]
        %v532 = vld [vmem:[%s481 + $0x24] sm:$0xf]
        %v533 = vld [vmem:[%s481 + $0x28] sm:$0xf]
        %v534 = vld [vmem:[%s481 + $0x2c] sm:$0xf]
        %v535 = vld [vmem:[%s481 + $0x30] sm:$0xf]
        %v536 = vld [vmem:[%s481 + $0x34] sm:$0xf]
        %v537 = vld [vmem:[%s481 + $0x38] sm:$0xf]
        %v538 = vld [vmem:[%s481 + $0x3c] sm:$0xf]
        %v539 = vld [vmem:[%s481 + $0x40] sm:$0xf]
        %v540 = vld [vmem:[%s481 + $0x44] sm:$0xf]
        %v541 = vld [vmem:[%s481 + $0x48] sm:$0xf]
        %v542 = vld [vmem:[%s481 + $0x4c] sm:$0xf]
        %v543 = vld [vmem:[%s481 + $0x50] sm:$0xf]
        %v544 = vld [vmem:[%s481 + $0x54] sm:$0xf]
        %v545 = vld [vmem:[%s481 + $0x58] sm:$0xf]
        %v546 = vld [vmem:[%s481 + $0x5c] sm:$0xf]
        %v547 = vld [vmem:[%s481 + $0x60] sm:$0xf]
        %v548 = vld [vmem:[%s481 + $0x64] sm:$0xf]
        %v549 = vld [vmem:[%s481 + $0x68] sm:$0xf]
        %v550 = vld [vmem:[%s481 + $0x6c] sm:$0xf]
        %v551 = vld [vmem:[%s481 + $0x70] sm:$0xf]
        %v552 = vld [vmem:[%s481 + $0x74] sm:$0xf]
        %v553 = vld [vmem:[%s481 + $0x78] sm:$0xf]
        %v554 = vld [vmem:[%s481 + $0x7c] sm:$0xf]
        %v555 = vld [vmem:[%s1] sm:$0xf]
        %v556 = vld [vmem:[%s1 + $0x4] sm:$0xf]
        %v557 = vld [vmem:[%s1 + $0x8] sm:$0xf]
        %v558 = vld [vmem:[%s1 + $0xc] sm:$0xf]
        %v559 = vld [vmem:[%s2] sm:$0x1]
        %v561 = vlaneseq
        %v562 = vshrl.u32 %v561, 7
        %v563 = vsub.s32 0, %v562
        %v564 = vrot.slane %v559, %v563
        %v598 = vunpack.c.l.b16 %v523
        %v599 = vunpack.c.l.b16 %v524
        %v600 = vunpack.c.l.b16 %v525
        %v601 = vunpack.c.l.b16 %v526
        %v602 = vunpack.c.l.b16 %v527
        %v603 = vunpack.c.l.b16 %v528
        %v604 = vunpack.c.l.b16 %v529
        %v605 = vunpack.c.l.b16 %v530
        %v606 = vunpack.c.l.b16 %v531
        %v607 = vunpack.c.l.b16 %v532
        %v608 = vunpack.c.l.b16 %v533
        %v609 = vunpack.c.l.b16 %v534
        %v610 = vunpack.c.l.b16 %v535
        %v611 = vunpack.c.l.b16 %v536
        %v612 = vunpack.c.l.b16 %v537
        %v613 = vunpack.c.l.b16 %v538
        %v614 = vunpack.c.l.b16 %v539
        %v615 = vunpack.c.l.b16 %v540
        %v616 = vunpack.c.l.b16 %v541
        %v617 = vunpack.c.l.b16 %v542
        %v618 = vunpack.c.l.b16 %v543
        %v619 = vunpack.c.l.b16 %v544
        %v620 = vunpack.c.l.b16 %v545
        %v621 = vunpack.c.l.b16 %v546
        %v622 = vunpack.c.l.b16 %v547
        %v623 = vunpack.c.l.b16 %v548
        %v624 = vunpack.c.l.b16 %v549
        %v625 = vunpack.c.l.b16 %v550
        %v626 = vunpack.c.l.b16 %v551
        %v627 = vunpack.c.l.b16 %v552
        %v628 = vunpack.c.l.b16 %v553
        %v629 = vunpack.c.l.b16 %v554
        %v630 = vpack.c.b16 %v599, %v598
        %v631 = vpack.c.b16 %v601, %v600
        %v632 = vpack.c.b16 %v603, %v602
        %v633 = vpack.c.b16 %v605, %v604
        %v634 = vpack.c.b16 %v607, %v606
        %v635 = vpack.c.b16 %v609, %v608
        %v636 = vpack.c.b16 %v611, %v610
        %v637 = vpack.c.b16 %v613, %v612
        %v638 = vpack.c.b16 %v615, %v614
        %v639 = vpack.c.b16 %v617, %v616
        %v640 = vpack.c.b16 %v619, %v618
        %v641 = vpack.c.b16 %v621, %v620
        %v642 = vpack.c.b16 %v623, %v622
        %v643 = vpack.c.b16 %v625, %v624
        %v644 = vpack.c.b16 %v627, %v626
        %v645 = vpack.c.b16 %v629, %v628
        %v650 = vunpack.c.l.b16 %v555
        %v651 = vunpack.c.l.b16 %v556
        %v652 = vunpack.c.l.b16 %v557
        %v653 = vunpack.c.l.b16 %v558
        %v654 = vpack.c.b16 %v651, %v650
        %v655 = vpack.c.b16 %v653, %v652
        %vm658 = vcmask 261120
        %v660 = vsel %vm658, %v630, 0
        %v663 = vsel %vm658, %v631, 0
        %v666 = vsel %vm658, %v632, 0
        %v669 = vsel %vm658, %v633, 0
        %v672 = vsel %vm658, %v634, 0
        %v675 = vsel %vm658, %v635, 0
        %v678 = vsel %vm658, %v636, 0
        %v681 = vsel %vm658, %v637, 0
        %v684 = vsel %vm658, %v638, 0
        %v687 = vsel %vm658, %v639, 0
        %v690 = vsel %vm658, %v640, 0
        %v693 = vsel %vm658, %v641, 0
        %v696 = vsel %vm658, %v642, 0
        %v699 = vsel %vm658, %v643, 0
        %v702 = vsel %vm658, %v644, 0
        %v705 = vsel %vm658, %v645, 0
        %707 = vmatprep.subr.bf16.mxu0 0
        %708 = vmatpush1.bf16.msra.mxu0 %v654
        %709 = vmatprep.subr.bf16.mxu0 0
        %710 = vmatpush1.bf16.msra.mxu0 %v655
        %711 = vmatprep.subr.bf16.mxu0 0
        %712 = vmatpush1.bf16.msra.mxu0 0
        %713 = vmatprep.subr.bf16.mxu0 0
        %714 = vmatpush1.bf16.msra.mxu0 0
        %715 = vmatprep.subr.bf16.mxu0 0
        %716 = vmatpush1.bf16.msra.mxu0 0
        %717 = vmatprep.subr.bf16.mxu0 0
        %718 = vmatpush1.bf16.msra.mxu0 0
        %719 = vmatprep.subr.bf16.mxu0 0
        %720 = vmatpush1.bf16.msra.mxu0 0
        %721 = vmatprep.subr.bf16.mxu0 0
        %722 = vmatpush1.bf16.msra.mxu0 0
        %723 = vmatprep.subr.bf16.mxu0 0
        %724 = vmatpush1.bf16.msra.mxu0 0
        %725 = vmatprep.subr.bf16.mxu0 0
        %726 = vmatpush1.bf16.msra.mxu0 0
        %727 = vmatprep.subr.bf16.mxu0 0
        %728 = vmatpush1.bf16.msra.mxu0 0
        %729 = vmatprep.subr.bf16.mxu0 0
        %730 = vmatpush1.bf16.msra.mxu0 0
        %731 = vmatprep.subr.bf16.mxu0 0
        %732 = vmatpush1.bf16.msra.mxu0 0
        %733 = vmatprep.subr.bf16.mxu0 0
        %734 = vmatpush1.bf16.msra.mxu0 0
        %735 = vmatprep.subr.bf16.mxu0 0
        %736 = vmatpush1.bf16.msra.mxu0 0
        %737 = vmatprep.subr.bf16.mxu0 0
        %738 = vmatpush1.bf16.msra.mxu0 0
        %739 = vmatprep.mubr.bf16.mxu0 0
        %740 = vmatmul.mubr.bf16.gmra.mrb[0].mxu0 %v660
        %v741 = vpop.f32.mrb[0].mxu0
        %v742 = vadd.f32 %v564, %v741
        %v743 = vpop.f32.mrb[0].mxu0
        %v744 = vpop.f32.mrb[0].mxu0
        %v745 = vadd.f32 %v564, %v744
        %v746 = vpop.f32.mrb[0].mxu0
        %747 = vmatprep.mubr.bf16.mxu0 0
        %748 = vmatmul.mubr.bf16.gmra.mrb[0].mxu0 %v663
        %v749 = vpop.f32.mrb[0].mxu0
        %v750 = vadd.f32 %v564, %v749
        %v751 = vpop.f32.mrb[0].mxu0
        %v752 = vpop.f32.mrb[0].mxu0
        %v753 = vadd.f32 %v564, %v752
        %v754 = vpop.f32.mrb[0].mxu0
        %755 = vmatprep.mubr.bf16.mxu0 0
        %756 = vmatmul.mubr.bf16.gmra.mrb[0].mxu0 %v666
        %v757 = vpop.f32.mrb[0].mxu0
        %v758 = vadd.f32 %v564, %v757
        %v759 = vpop.f32.mrb[0].mxu0
        %v760 = vpop.f32.mrb[0].mxu0
        %v761 = vadd.f32 %v564, %v760
        %v762 = vpop.f32.mrb[0].mxu0
        %763 = vmatprep.mubr.bf16.mxu0 0
        %764 = vmatmul.mubr.bf16.gmra.mrb[0].mxu0 %v669
        %v765 = vpop.f32.mrb[0].mxu0
        %v766 = vadd.f32 %v564, %v765
        %v767 = vpop.f32.mrb[0].mxu0
        %v768 = vpop.f32.mrb[0].mxu0
        %v769 = vadd.f32 %v564, %v768
        %v770 = vpop.f32.mrb[0].mxu0
        %771 = vmatprep.mubr.bf16.mxu0 0
        %772 = vmatmul.mubr.bf16.gmra.mrb[0].mxu0 %v672
        %v773 = vpop.f32.mrb[0].mxu0
        %v774 = vadd.f32 %v564, %v773
        %v775 = vpop.f32.mrb[0].mxu0
        %v776 = vpop.f32.mrb[0].mxu0
        %v777 = vadd.f32 %v564, %v776
        %v778 = vpop.f32.mrb[0].mxu0
        %779 = vmatprep.mubr.bf16.mxu0 0
        %780 = vmatmul.mubr.bf16.gmra.mrb[0].mxu0 %v675
        %v781 = vpop.f32.mrb[0].mxu0
        %v782 = vadd.f32 %v564, %v781
        %v783 = vpop.f32.mrb[0].mxu0
        %v784 = vpop.f32.mrb[0].mxu0
        %v785 = vadd.f32 %v564, %v784
        %v786 = vpop.f32.mrb[0].mxu0
        %787 = vmatprep.mubr.bf16.mxu0 0
        %788 = vmatmul.mubr.bf16.gmra.mrb[0].mxu0 %v678
        %v789 = vpop.f32.mrb[0].mxu0
        %v790 = vadd.f32 %v564, %v789
        %v791 = vpop.f32.mrb[0].mxu0
        %v792 = vpop.f32.mrb[0].mxu0
        %v793 = vadd.f32 %v564, %v792
        %v794 = vpop.f32.mrb[0].mxu0
        %795 = vmatprep.mubr.bf16.mxu0 0
        %796 = vmatmul.mubr.bf16.gmra.mrb[0].mxu0 %v681
        %v797 = vpop.f32.mrb[0].mxu0
        %v798 = vadd.f32 %v564, %v797
        %v799 = vpop.f32.mrb[0].mxu0
        %v800 = vpop.f32.mrb[0].mxu0
        %v801 = vadd.f32 %v564, %v800
        %v802 = vpop.f32.mrb[0].mxu0
        %803 = vmatprep.mubr.bf16.mxu0 0
        %804 = vmatmul.mubr.bf16.gmra.mrb[0].mxu0 %v684
        %v805 = vpop.f32.mrb[0].mxu0
        %v806 = vadd.f32 %v564, %v805
        %v807 = vpop.f32.mrb[0].mxu0
        %v808 = vpop.f32.mrb[0].mxu0
        %v809 = vadd.f32 %v564, %v808
        %v810 = vpop.f32.mrb[0].mxu0
        %811 = vmatprep.mubr.bf16.mxu0 0
        %812 = vmatmul.mubr.bf16.gmra.mrb[0].mxu0 %v687
        %v813 = vpop.f32.mrb[0].mxu0
        %v814 = vadd.f32 %v564, %v813
        %v815 = vpop.f32.mrb[0].mxu0
        %v816 = vpop.f32.mrb[0].mxu0
        %v817 = vadd.f32 %v564, %v816
        %v818 = vpop.f32.mrb[0].mxu0
        %819 = vmatprep.mubr.bf16.mxu0 0
        %820 = vmatmul.mubr.bf16.gmra.mrb[0].mxu0 %v690
        %v821 = vpop.f32.mrb[0].mxu0
        %v822 = vadd.f32 %v564, %v821
        %v823 = vpop.f32.mrb[0].mxu0
        %v824 = vpop.f32.mrb[0].mxu0
        %v825 = vadd.f32 %v564, %v824
        %v826 = vpop.f32.mrb[0].mxu0
        %827 = vmatprep.mubr.bf16.mxu0 0
        %828 = vmatmul.mubr.bf16.gmra.mrb[0].mxu0 %v693
        %v829 = vpop.f32.mrb[0].mxu0
        %v830 = vadd.f32 %v564, %v829
        %v831 = vpop.f32.mrb[0].mxu0
        %v832 = vpop.f32.mrb[0].mxu0
        %v833 = vadd.f32 %v564, %v832
        %v834 = vpop.f32.mrb[0].mxu0
        %835 = vmatprep.mubr.bf16.mxu0 0
        %836 = vmatmul.mubr.bf16.gmra.mrb[0].mxu0 %v696
        %v837 = vpop.f32.mrb[0].mxu0
        %v838 = vadd.f32 %v564, %v837
        %v839 = vpop.f32.mrb[0].mxu0
        %v840 = vpop.f32.mrb[0].mxu0
        %v841 = vadd.f32 %v564, %v840
        %v842 = vpop.f32.mrb[0].mxu0
        %843 = vmatprep.mubr.bf16.mxu0 0
        %844 = vmatmul.mubr.bf16.gmra.mrb[0].mxu0 %v699
        %v845 = vpop.f32.mrb[0].mxu0
        %v846 = vadd.f32 %v564, %v845
        %v847 = vpop.f32.mrb[0].mxu0
        %v848 = vpop.f32.mrb[0].mxu0
        %v849 = vadd.f32 %v564, %v848
        %v850 = vpop.f32.mrb[0].mxu0
        %851 = vmatprep.mubr.bf16.mxu0 0
        %852 = vmatmul.mubr.bf16.gmra.mrb[0].mxu0 %v702
        %v853 = vpop.f32.mrb[0].mxu0
        %v854 = vadd.f32 %v564, %v853
        %v855 = vpop.f32.mrb[0].mxu0
        %v856 = vpop.f32.mrb[0].mxu0
        %v857 = vadd.f32 %v564, %v856
        %v858 = vpop.f32.mrb[0].mxu0
        %859 = vmatprep.mubr.bf16.mxu0 0
        %860 = vmatmul.mubr.bf16.gmra.mrb[0].mxu0 %v705
        %v861 = vpop.f32.mrb[0].mxu0
        %v862 = vadd.f32 %v564, %v861
        %v863 = vpop.f32.mrb[0].mxu0
        %v864 = vpop.f32.mrb[0].mxu0
        %v865 = vadd.f32 %v564, %v864
        %v866 = vpop.f32.mrb[0].mxu0
        %867 = vdwg.mxu0
        %v868 = vmax.f32 %v742, 0.0
        %v869 = vmax.f32 %v745, 0.0
        %v870 = vmax.f32 %v750, 0.0
        %v871 = vmax.f32 %v753, 0.0
        %v872 = vmax.f32 %v758, 0.0
        %v873 = vmax.f32 %v761, 0.0
        %v874 = vmax.f32 %v766, 0.0
        %v875 = vmax.f32 %v769, 0.0
        %v876 = vmax.f32 %v774, 0.0
        %v877 = vmax.f32 %v777, 0.0
        %v878 = vmax.f32 %v782, 0.0
        %v879 = vmax.f32 %v785, 0.0
        %v880 = vmax.f32 %v790, 0.0
        %v881 = vmax.f32 %v793, 0.0
        %v882 = vmax.f32 %v798, 0.0
        %v883 = vmax.f32 %v801, 0.0
        %v884 = vmax.f32 %v806, 0.0
        %v885 = vmax.f32 %v809, 0.0
        %v886 = vmax.f32 %v814, 0.0
        %v887 = vmax.f32 %v817, 0.0
        %v888 = vmax.f32 %v822, 0.0
        %v889 = vmax.f32 %v825, 0.0
        %v890 = vmax.f32 %v830, 0.0
        %v891 = vmax.f32 %v833, 0.0
        %v892 = vmax.f32 %v838, 0.0
        %v893 = vmax.f32 %v841, 0.0
        %v894 = vmax.f32 %v846, 0.0
        %v895 = vmax.f32 %v849, 0.0
        %v896 = vmax.f32 %v854, 0.0
        %v897 = vmax.f32 %v857, 0.0
        %v898 = vmax.f32 %v862, 0.0
        %v899 = vmax.f32 %v865, 0.0
        %v900 = vld [vmem:[#allocation2] sm:$0xff]
        %vm901 = vcmask 523264
        %v902 = vsel %vm901, %v868, 0.0
        %v903 = vsel %vm901, %v869, 0.0
        %v904 = vadd.f32 %v902, %v903
        %v905 = vsel %vm901, %v870, 0.0
        %v906 = vadd.f32 %v904, %v905
        %v907 = vsel %vm901, %v871, 0.0
        %v908 = vadd.f32 %v906, %v907
        %v909 = vrot.slane %v908, 4
        %v910 = vadd.f32 %v908, %v909
        %v911 = vrot.slane %v910, 2
        %v912 = vadd.f32 %v910, %v911
        %v913 = vrot.slane %v912, 1
        %v914 = vadd.f32 %v912, %v913
        %v915 = vsel %vm901, %v872, 0.0
        %v916 = vsel %vm901, %v873, 0.0
        %v917 = vadd.f32 %v915, %v916
        %v918 = vsel %vm901, %v874, 0.0
        %v919 = vadd.f32 %v917, %v918
        %v920 = vsel %vm901, %v875, 0.0
        %v921 = vadd.f32 %v919, %v920
        %v922 = vrot.slane %v921, 4
        %v923 = vadd.f32 %v921, %v922
        %v924 = vrot.slane %v923, 2
        %v925 = vadd.f32 %v923, %v924
        %v926 = vrot.slane %v925, 1
        %v927 = vadd.f32 %v925, %v926
        %v928 = vsel %vm901, %v876, 0.0
        %v929 = vsel %vm901, %v877, 0.0
        %v930 = vadd.f32 %v928, %v929
        %v931 = vsel %vm901, %v878, 0.0
        %v932 = vadd.f32 %v930, %v931
        %v933 = vsel %vm901, %v879, 0.0
        %v934 = vadd.f32 %v932, %v933
        %v935 = vrot.slane %v934, 4
        %v936 = vadd.f32 %v934, %v935
        %v937 = vrot.slane %v936, 2
        %v938 = vadd.f32 %v936, %v937
        %v939 = vrot.slane %v938, 1
        %v940 = vadd.f32 %v938, %v939
        %v941 = vsel %vm901, %v880, 0.0
        %v942 = vsel %vm901, %v881, 0.0
        %v943 = vadd.f32 %v941, %v942
        %v944 = vsel %vm901, %v882, 0.0
        %v945 = vadd.f32 %v943, %v944
        %v946 = vsel %vm901, %v883, 0.0
        %v947 = vadd.f32 %v945, %v946
        %v948 = vrot.slane %v947, 4
        %v949 = vadd.f32 %v947, %v948
        %v950 = vrot.slane %v949, 2
        %v951 = vadd.f32 %v949, %v950
        %v952 = vrot.slane %v951, 1
        %v953 = vadd.f32 %v951, %v952
        %v954 = vsel %vm901, %v884, 0.0
        %v955 = vsel %vm901, %v885, 0.0
        %v956 = vadd.f32 %v954, %v955
        %v957 = vsel %vm901, %v886, 0.0
        %v958 = vadd.f32 %v956, %v957
        %v959 = vsel %vm901, %v887, 0.0
        %v960 = vadd.f32 %v958, %v959
        %v961 = vrot.slane %v960, 4
        %v962 = vadd.f32 %v960, %v961
        %v963 = vrot.slane %v962, 2
        %v964 = vadd.f32 %v962, %v963
        %v965 = vrot.slane %v964, 1
        %v966 = vadd.f32 %v964, %v965
        %v967 = vsel %vm901, %v888, 0.0
        %v968 = vsel %vm901, %v889, 0.0
        %v969 = vadd.f32 %v967, %v968
        %v970 = vsel %vm901, %v890, 0.0
        %v971 = vadd.f32 %v969, %v970
        %v972 = vsel %vm901, %v891, 0.0
        %v973 = vadd.f32 %v971, %v972
        %v974 = vrot.slane %v973, 4
        %v975 = vadd.f32 %v973, %v974
        %v976 = vrot.slane %v975, 2
        %v977 = vadd.f32 %v975, %v976
        %v978 = vrot.slane %v977, 1
        %v979 = vadd.f32 %v977, %v978
        %v980 = vsel %vm901, %v892, 0.0
        %v981 = vsel %vm901, %v893, 0.0
        %v982 = vadd.f32 %v980, %v981
        %v983 = vsel %vm901, %v894, 0.0
        %v984 = vadd.f32 %v982, %v983
        %v985 = vsel %vm901, %v895, 0.0
        %v986 = vadd.f32 %v984, %v985
        %v987 = vrot.slane %v986, 4
        %v988 = vadd.f32 %v986, %v987
        %v989 = vrot.slane %v988, 2
        %v990 = vadd.f32 %v988, %v989
        %v991 = vrot.slane %v990, 1
        %v992 = vadd.f32 %v990, %v991
        %v993 = vsel %vm901, %v896, 0.0
        %v994 = vsel %vm901, %v897, 0.0
        %v995 = vadd.f32 %v993, %v994
        %v996 = vsel %vm901, %v898, 0.0
        %v997 = vadd.f32 %v995, %v996
        %v998 = vsel %vm901, %v899, 0.0
        %v999 = vadd.f32 %v997, %v998
        %v1000 = vrot.slane %v999, 4
        %v1001 = vadd.f32 %v999, %v1000
        %v1002 = vrot.slane %v1001, 2
        %v1003 = vadd.f32 %v1001, %v1002
        %v1004 = vrot.slane %v1003, 1
        %v1005 = vadd.f32 %v1003, %v1004
        %vm1014 = vcmask 1041409
        %v1015 = vsel %vm1014, %v927, %v914
        %vm1016 = vcmask 1042434
        %v1017 = vsel %vm1016, %v940, %v1015
        %vm1018 = vcmask 1043459
        %v1019 = vsel %vm1018, %v953, %v1017
        %vm1020 = vcmask 1044484
        %v1021 = vsel %vm1020, %v966, %v1019
        %vm1022 = vcmask 1045509
        %v1023 = vsel %vm1022, %v979, %v1021
        %vm1024 = vcmask 1046534
        %v1025 = vsel %vm1024, %v992, %v1023
        %vm1026 = vcmask 1047559
        %v1027 = vsel %vm1026, %v1005, %v1025
        %v1029 = vadd.f32 %v900, %v1027
        %1030 = vst.msk [vmem:[#allocation2] sm:$0xff] %vm901, %v1029
        %p1031 = scmp.eq.s32.totalorder %s28, 1
        // Predicated region
        $region102: #{tpu_custom_call.1} parent=92 // pred_check
          %p1032 = pneg %p1031
        $region103: #{tpu_custom_call.1} parent=92 // pred_check_branch
          %1034 = sbr.rel (%p1032) target = $region105
        $region104: #{tpu_custom_call.1} parent=92 // pred_region
          %v1035 = vld [vmem:[#allocation2] sm:$0xff]
          %v1036 = vpack.c.bf16 %v1035, %v1035
          %v1037 = vld [vmem:[%s3] sm:$0xf]
          %v1038 = vld [vmem:[%s3 + $0x4] sm:$0xf]
          %v1039 = vld [vmem:[%s3 + $0x8] sm:$0xf]
          %v1040 = vld [vmem:[%s3 + $0xc] sm:$0xf]
          %v1041 = vld [vmem:[%s3 + $0x10] sm:$0xf]
          %v1042 = vld [vmem:[%s3 + $0x14] sm:$0xf]
          %v1043 = vld [vmem:[%s3 + $0x18] sm:$0xf]
          %v1044 = vld [vmem:[%s3 + $0x1c] sm:$0xf]
          %v1045 = vld [vmem:[%s4] sm:$0x1]
          %v1046 = vmul.f32 %v1045, 64.0
          %v1048 = vlaneseq
          %v1049 = vshrl.u32 %v1048, 7
          %v1050 = vsub.s32 0, %v1049
          %v1051 = vrot.slane %v1046, %v1050
          %v1061 = vunpack.c.l.b16 %v1037
          %v1062 = vunpack.c.l.b16 %v1038
          %v1063 = vunpack.c.l.b16 %v1039
          %v1064 = vunpack.c.l.b16 %v1040
          %v1065 = vunpack.c.l.b16 %v1041
          %v1066 = vunpack.c.l.b16 %v1042
          %v1067 = vunpack.c.l.b16 %v1043
          %v1068 = vunpack.c.l.b16 %v1044
          %v1069 = vpack.c.b16 %v1062, %v1061
          %v1070 = vpack.c.b16 %v1064, %v1063
          %v1071 = vpack.c.b16 %v1066, %v1065
          %v1072 = vpack.c.b16 %v1068, %v1067
          %v1078 = vsel %vm901, %v1036, 0
          %1080 = vmatprep.subr.bf16.mxu0 0
          %1081 = vmatpush1.bf16.msra.mxu0 %v1069
          %1082 = vmatprep.subr.bf16.mxu0 0
          %1083 = vmatpush1.bf16.msra.mxu0 %v1070
          %1084 = vmatprep.subr.bf16.mxu0 0
          %1085 = vmatpush1.bf16.msra.mxu0 %v1071
          %1086 = vmatprep.subr.bf16.mxu0 0
          %1087 = vmatpush1.bf16.msra.mxu0 %v1072
          %1088 = vmatprep.subr.bf16.mxu0 0
          %1089 = vmatpush1.bf16.msra.mxu0 0
          %1090 = vmatprep.subr.bf16.mxu0 0
          %1091 = vmatpush1.bf16.msra.mxu0 0
          %1092 = vmatprep.subr.bf16.mxu0 0
          %1093 = vmatpush1.bf16.msra.mxu0 0
          %1094 = vmatprep.subr.bf16.mxu0 0
          %1095 = vmatpush1.bf16.msra.mxu0 0
          %1096 = vmatprep.subr.bf16.mxu0 0
          %1097 = vmatpush1.bf16.msra.mxu0 0
          %1098 = vmatprep.subr.bf16.mxu0 0
          %1099 = vmatpush1.bf16.msra.mxu0 0
          %1100 = vmatprep.subr.bf16.mxu0 0
          %1101 = vmatpush1.bf16.msra.mxu0 0
          %1102 = vmatprep.subr.bf16.mxu0 0
          %1103 = vmatpush1.bf16.msra.mxu0 0
          %1104 = vmatprep.subr.bf16.mxu0 0
          %1105 = vmatpush1.bf16.msra.mxu0 0
          %1106 = vmatprep.subr.bf16.mxu0 0
          %1107 = vmatpush1.bf16.msra.mxu0 0
          %1108 = vmatprep.subr.bf16.mxu0 0
          %1109 = vmatpush1.bf16.msra.mxu0 0
          %1110 = vmatprep.subr.bf16.mxu0 0
          %1111 = vmatpush1.bf16.msra.mxu0 0
          %1112 = vmatprep.mubr.bf16.mxu0 0
          %1113 = vmatmul.mubr.bf16.gmra.mrb[0].mxu0 %v1078
          %v1114 = vpop.f32.mrb[0].mxu0
          %v1115 = vadd.f32 %v1051, %v1114
          %v1116 = vpop.f32.mrb[0].mxu0
          %v1117 = vpop.f32.mrb[0].mxu0
          %v1118 = vpop.f32.mrb[0].mxu0
          %1119 = vdwg.mxu0
          %v1120 = vpack.c.bf16 %v1115, %v1115
          %v1121 = vld [vmem:[%s5] sm:$0xf]
          %v1122 = vld [vmem:[%s5 + $0x4] sm:$0xf]
          %v1123 = vld [vmem:[%s5 + $0x8] sm:$0xf]
          %v1124 = vld [vmem:[%s5 + $0xc] sm:$0xf]
          %v1125 = vld [vmem:[%s5 + $0x10] sm:$0xf]
          %v1126 = vld [vmem:[%s5 + $0x14] sm:$0xf]
          %v1127 = vld [vmem:[%s5 + $0x18] sm:$0xf]
          %v1128 = vld [vmem:[%s5 + $0x1c] sm:$0xf]
          %v1129 = vld [vmem:[%s6] sm:$0x1]
          %v1131 = vlaneseq
          %v1132 = vshrl.u32 %v1131, 7
          %v1133 = vsub.s32 0, %v1132
          %v1134 = vrot.slane %v1129, %v1133
          %v1144 = vunpack.c.l.b16 %v1121
          %v1145 = vunpack.c.l.b16 %v1122
          %v1146 = vunpack.c.l.b16 %v1123
          %v1147 = vunpack.c.l.b16 %v1124
          %v1148 = vunpack.c.l.b16 %v1125
          %v1149 = vunpack.c.l.b16 %v1126
          %v1150 = vunpack.c.l.b16 %v1127
          %v1151 = vunpack.c.l.b16 %v1128
          %v1152 = vpack.c.b16 %v1145, %v1144
          %v1153 = vpack.c.b16 %v1147, %v1146
          %v1154 = vpack.c.b16 %v1149, %v1148
          %v1155 = vpack.c.b16 %v1151, %v1150
          %v1161 = vsel %vm901, %v1120, 0
          %1163 = vmatprep.subr.bf16.mxu0 0
          %1164 = vmatpush1.bf16.msra.mxu0 %v1152
          %1165 = vmatprep.subr.bf16.mxu0 0
          %1166 = vmatpush1.bf16.msra.mxu0 %v1153
          %1167 = vmatprep.subr.bf16.mxu0 0
          %1168 = vmatpush1.bf16.msra.mxu0 %v1154
          %1169 = vmatprep.subr.bf16.mxu0 0
          %1170 = vmatpush1.bf16.msra.mxu0 %v1155
          %1171 = vmatprep.subr.bf16.mxu0 0
          %1172 = vmatpush1.bf16.msra.mxu0 0
          %1173 = vmatprep.subr.bf16.mxu0 0
          %1174 = vmatpush1.bf16.msra.mxu0 0
          %1175 = vmatprep.subr.bf16.mxu0 0
          %1176 = vmatpush1.bf16.msra.mxu0 0
          %1177 = vmatprep.subr.bf16.mxu0 0
          %1178 = vmatpush1.bf16.msra.mxu0 0
          %1179 = vmatprep.subr.bf16.mxu0 0
          %1180 = vmatpush1.bf16.msra.mxu0 0
          %1181 = vmatprep.subr.bf16.mxu0 0
          %1182 = vmatpush1.bf16.msra.mxu0 0
          %1183 = vmatprep.subr.bf16.mxu0 0
          %1184 = vmatpush1.bf16.msra.mxu0 0
          %1185 = vmatprep.subr.bf16.mxu0 0
          %1186 = vmatpush1.bf16.msra.mxu0 0
          %1187 = vmatprep.subr.bf16.mxu0 0
          %1188 = vmatpush1.bf16.msra.mxu0 0
          %1189 = vmatprep.subr.bf16.mxu0 0
          %1190 = vmatpush1.bf16.msra.mxu0 0
          %1191 = vmatprep.subr.bf16.mxu0 0
          %1192 = vmatpush1.bf16.msra.mxu0 0
          %1193 = vmatprep.subr.bf16.mxu0 0
          %1194 = vmatpush1.bf16.msra.mxu0 0
          %1195 = vmatprep.mubr.bf16.mxu0 0
          %1196 = vmatmul.mubr.bf16.gmra.mrb[0].mxu0 %v1161
          %v1197 = vpop.f32.mrb[0].mxu0
          %v1198 = vadd.f32 %v1134, %v1197
          %v1199 = vpop.f32.mrb[0].mxu0
          %v1200 = vpop.f32.mrb[0].mxu0
          %v1201 = vpop.f32.mrb[0].mxu0
          %1202 = vdwg.mxu0
          %v1203 = vmax.f32 %v1198, 0.0
          %v1204 = vpack.c.bf16 %v1203, %v1203
          %v1205 = vld [vmem:[%s7] sm:$0xf]
          %v1206 = vld [vmem:[%s7 + $0x4] sm:$0xf]
          %v1207 = vld [vmem:[%s7 + $0x8] sm:$0xf]
          %v1208 = vld [vmem:[%s7 + $0xc] sm:$0xf]
          %v1209 = vld [vmem:[%s7 + $0x10] sm:$0xf]
          %v1210 = vld [vmem:[%s7 + $0x14] sm:$0xf]
          %v1211 = vld [vmem:[%s7 + $0x18] sm:$0xf]
          %v1212 = vld [vmem:[%s7 + $0x1c] sm:$0xf]
          %v1213 = vld [vmem:[%s8] sm:$0x1]
          %v1215 = vlaneseq
          %v1216 = vshrl.u32 %v1215, 7
          %v1217 = vsub.s32 0, %v1216
          %v1218 = vrot.slane %v1213, %v1217
          %v1228 = vunpack.c.l.b16 %v1205
          %v1229 = vunpack.c.l.b16 %v1206
          %v1230 = vunpack.c.l.b16 %v1207
          %v1231 = vunpack.c.l.b16 %v1208
          %v1232 = vunpack.c.l.b16 %v1209
          %v1233 = vunpack.c.l.b16 %v1210
          %v1234 = vunpack.c.l.b16 %v1211
          %v1235 = vunpack.c.l.b16 %v1212
          %v1236 = vpack.c.b16 %v1229, %v1228
          %v1237 = vpack.c.b16 %v1231, %v1230
          %v1238 = vpack.c.b16 %v1233, %v1232
          %v1239 = vpack.c.b16 %v1235, %v1234
          %v1245 = vsel %vm901, %v1204, 0
          %1247 = vmatprep.subr.bf16.mxu0 0
          %1248 = vmatpush1.bf16.msra.mxu0 %v1236
          %1249 = vmatprep.subr.bf16.mxu0 0
          %1250 = vmatpush1.bf16.msra.mxu0 %v1237
          %1251 = vmatprep.subr.bf16.mxu0 0
          %1252 = vmatpush1.bf16.msra.mxu0 %v1238
          %1253 = vmatprep.subr.bf16.mxu0 0
          %1254 = vmatpush1.bf16.msra.mxu0 %v1239
          %1255 = vmatprep.subr.bf16.mxu0 0
          %1256 = vmatpush1.bf16.msra.mxu0 0
          %1257 = vmatprep.subr.bf16.mxu0 0
          %1258 = vmatpush1.bf16.msra.mxu0 0
          %1259 = vmatprep.subr.bf16.mxu0 0
          %1260 = vmatpush1.bf16.msra.mxu0 0
          %1261 = vmatprep.subr.bf16.mxu0 0
          %1262 = vmatpush1.bf16.msra.mxu0 0
          %1263 = vmatprep.subr.bf16.mxu0 0
          %1264 = vmatpush1.bf16.msra.mxu0 0
          %1265 = vmatprep.subr.bf16.mxu0 0
          %1266 = vmatpush1.bf16.msra.mxu0 0
          %1267 = vmatprep.subr.bf16.mxu0 0
          %1268 = vmatpush1.bf16.msra.mxu0 0
          %1269 = vmatprep.subr.bf16.mxu0 0
          %1270 = vmatpush1.bf16.msra.mxu0 0
          %1271 = vmatprep.subr.bf16.mxu0 0
          %1272 = vmatpush1.bf16.msra.mxu0 0
          %1273 = vmatprep.subr.bf16.mxu0 0
          %1274 = vmatpush1.bf16.msra.mxu0 0
          %1275 = vmatprep.subr.bf16.mxu0 0
          %1276 = vmatpush1.bf16.msra.mxu0 0
          %1277 = vmatprep.subr.bf16.mxu0 0
          %1278 = vmatpush1.bf16.msra.mxu0 0
          %1279 = vmatprep.mubr.bf16.mxu0 0
          %1280 = vmatmul.mubr.bf16.gmra.mrb[0].mxu0 %v1245
          %v1281 = vpop.f32.mrb[0].mxu0
          %v1282 = vadd.f32 %v1218, %v1281
          %v1283 = vpop.f32.mrb[0].mxu0
          %v1284 = vpop.f32.mrb[0].mxu0
          %v1285 = vpop.f32.mrb[0].mxu0
          %1286 = vdwg.mxu0
          %1287 = vst [vmem:[%s513] sm:$0xff] %v1282
        $region105: #{tpu_custom_call.1} parent=92 // pred_fallthru
          _
        %s1288 = sand.u32 %s239, 1
        %s1289 = scalar_lea.sflag [#allocation5], %s1288
        %s1290 = sand.u32 %s239, 1
        %s1291 = smul.addr %s1290, 8
        %s1292 = scalar_lea.vmem [#allocation4], %s1291
        // Predicated region
        $region106: #{tpu_custom_call.1} parent=92 // pred_check
          %p1293 = pneg %p249
        $region107: #{tpu_custom_call.1} parent=92 // pred_check_branch
          %1295 = sbr.rel (%p1293) target = $region109
        $region108: #{tpu_custom_call.1} parent=92 // pred_region
          %s1297 = ssub.s32 128, 128
          %1298 = vsyncadd %s1289, %s1297
          %s1299 = smul.addr %s27, 128
          %s1300 = scalar_lea.hbm %s9, %s1299
          %s1302 = sshll.u32 %s1292, 4
          %s1303 = int_to_ptr.vmem [resolvable:$true] %s1302
          %1305 = dma.vmem_to_hbm [thread:$0]  %s1303, 128, %s1300, %s1289
        $region109: #{tpu_custom_call.1} parent=92 // pred_fallthru
          _
      $region93: #{tpu_custom_call.1} parent=5 // pred_fallthru
        _
      %p1306 = scmp.le.s32.totalorder 2, %s18
      // Predicated region
      $region110: #{tpu_custom_call.1} parent=5 // pred_check
        %p1307 = pneg %p1306
      $region111: #{tpu_custom_call.1} parent=5 // pred_check_branch
        %1309 = sbr.rel (%p1307) target = $region113
      $region112: #{tpu_custom_call.1} parent=5 // pred_region
        %s1310 = ssub.s32 %s18, 2
        // Predicated region
        $region114: #{tpu_custom_call.1} parent=112 // pred_check
          %p1311 = pneg %p255
        $region115: #{tpu_custom_call.1} parent=112 // pred_check_branch
          %1313 = sbr.rel (%p1311) target = $region117
        $region116: #{tpu_custom_call.1} parent=112 // pred_region
          %s1314 = sand.u32 %s240, 1
          %s1315 = scalar_lea.sflag [#allocation5], %s1314
          %s1316 = sand.u32 %s240, 1
          %s1317 = smul.addr %s1316, 8
          %s1318 = scalar_lea.vmem [#allocation4], %s1317
          %1319 = dma.done %s1315, 128
        $region117: #{tpu_custom_call.1} parent=112 // pred_fallthru
          _
      $region113: #{tpu_custom_call.1} parent=5 // pred_fallthru
        _
    $region6: #{tpu_custom_call.1} parent=1 // loop_footer
      %s22 = sadd.s32 1, %s18
    $region7: #{tpu_custom_call.1} parent=1 // loop_footer_branch
      %17 = sbr.rel target = $region3
    $region8: #{tpu_custom_call.1} parent=1 // loop_exit
      _
    %1320 = vsyncpa [#allocation5], 1
    %s1321 = scalar_lea.sflag [#allocation5], 1
    %1322 = vsyncpa %s1321, 1

</llo_original>
